<compile_context>
chip_gen: v6e
topology: v6e:2x2x1
jax: 0.10.0
libtpu: 0.0.40
codegen_flags: <defaults>
</compile_context>

<pallas_src>
import functools
import math

import jax
import jax.numpy as jnp
from jax.experimental import pallas as pl
from jax.experimental.pallas import tpu as pltpu

EPS = 1.1920929e-07  # torch.finfo(float32).eps -> nn.RMSNorm(eps=None) behaviour


def _tile(dim, target, quantum):
    """Largest tile <= target, multiple of `quantum`, that evenly divides `dim`.
    Falls back to the full dimension (always a legal block size)."""
    if dim <= target:
        return dim
    t = (target // quantum) * quantum
    while t >= quantum:
        if dim % t == 0:
            return t
        t -= quantum
    return dim


# ------------------- fused RMSNorm + projection matmul ----------------------
def _norm_matmul_kernel(x_ref, nw_ref, w_ref, o_ref):
    x = x_ref[...].astype(jnp.float32)                       # (tm, K)
    ms = jnp.mean(x * x, axis=-1, keepdims=True)
    xn = x * jax.lax.rsqrt(ms + EPS) * nw_ref[...].astype(jnp.float32)
    o_ref[...] = jnp.dot(xn.astype(w_ref.dtype), w_ref[...],
                         preferred_element_type=jnp.float32).astype(o_ref.dtype)


def norm_matmul(x2, nw, w):
    # x2: (M, K), nw: (1, K), w: (K, N) -> rmsnorm(x2) @ w
    M, K = x2.shape
    N = w.shape[1]
    tm = _tile(M, 256, 8)
    tn = _tile(N, 256, 128)
    return pl.pallas_call(
        _norm_matmul_kernel,
        out_shape=jax.ShapeDtypeStruct((M, N), x2.dtype),
        grid=(M // tm, N // tn),
        in_specs=[pl.BlockSpec((tm, K), lambda i, j: (i, 0)),
                  pl.BlockSpec((1, K), lambda i, j: (0, 0)),
                  pl.BlockSpec((K, tn), lambda i, j: (0, j))],
        out_specs=pl.BlockSpec((tm, tn), lambda i, j: (i, j)),
        compiler_params=pltpu.CompilerParams(
            dimension_semantics=("parallel", "parallel")),
    )(x2, nw, w)


# ------------------- tiled matmul + fused residual add ----------------------
def _matmul_residual_kernel(a_ref, w_ref, r_ref, o_ref, acc_ref):
    @pl.when(pl.program_id(2) == 0)
    def _():
        acc_ref[...] = jnp.zeros_like(acc_ref)

    acc_ref[...] += jnp.dot(a_ref[...], w_ref[...],
                            preferred_element_type=jnp.float32)

    @pl.when(pl.program_id(2) == pl.num_programs(2) - 1)
    def _():
        o_ref[...] = (acc_ref[...] +
                      r_ref[...].astype(jnp.float32)).astype(o_ref.dtype)


def matmul_residual(a, w, res):
    # (a @ w) + res, tiled over (M, N, K) with an f32 VMEM accumulator.
    M, K = a.shape
    N = w.shape[1]
    tm = _tile(M, 256, 8)
    tn = _tile(N, 256, 128)
    tk = _tile(K, 512, 128)
    return pl.pallas_call(
        _matmul_residual_kernel,
        out_shape=jax.ShapeDtypeStruct((M, N), a.dtype),
        grid=(M // tm, N // tn, K // tk),
        in_specs=[pl.BlockSpec((tm, tk), lambda i, j, k: (i, k)),
                  pl.BlockSpec((tk, tn), lambda i, j, k: (k, j)),
                  pl.BlockSpec((tm, tn), lambda i, j, k: (i, j))],
        out_specs=pl.BlockSpec((tm, tn), lambda i, j, k: (i, j)),
        scratch_shapes=[pltpu.VMEM((tm, tn), jnp.float32)],
        compiler_params=pltpu.CompilerParams(
            dimension_semantics=("parallel", "parallel", "arbitrary")),
    )(a, w, res)


# ----------------------------- attention kernels ----------------------------
def _softmax_rows(s):
    m = jnp.max(s, axis=-1, keepdims=True)
    p = jnp.exp(s - m)
    denom = jnp.sum(p, axis=-1, keepdims=True)
    inv = pl.reciprocal(denom, approx=True)          # EUP slot
    inv = inv * (2.0 - denom * inv)                  # one Newton step -> full f32 accuracy
    return p * inv


def _self_attn_kernel(qkv_ref, cos_ref, sin_ref, o_ref, *, H, hd, scale):
    qkv = qkv_ref[0]                                  # (S, 3D), native dtype
    cos = cos_ref[...]                                # (S, hd), f32
    sin = sin_ref[...]
    D = H * hd
    half = hd // 2

    def rope(x):                                      # x: (S, hd) f32
        x1 = x[:, :half]
        x2 = x[:, half:]
        rot = jnp.concatenate([-x2, x1], axis=-1)
        return x * cos + rot * sin

    outs = []
    for h in range(H):                                # static unroll over heads
        q = rope(qkv[:, h * hd:(h + 1) * hd].astype(jnp.float32))
        k = rope(qkv[:, D + h * hd:D + (h + 1) * hd].astype(jnp.float32))
        v = qkv[:, 2 * D + h * hd:2 * D + (h + 1) * hd].astype(jnp.float32)
        s = jnp.dot(q, k.T, preferred_element_type=jnp.float32) * scale
        p = _softmax_rows(s)
        outs.append(jnp.dot(p, v, preferred_element_type=jnp.float32))
    # single lane-dense (S, D) store (no per-head width-8 partial stores)
    o_ref[0] = jnp.concatenate(outs, axis=-1).astype(o_ref.dtype)


def _cross_attn_kernel(q_ref, kv_ref, o_ref, *, H, hd, scale):
    qf = q_ref[0]                                     # (Sq, D)
    kv = kv_ref[0]                                    # (Sk, 2D)  = [K | V]
    D = H * hd
    outs = []
    for h in range(H):
        q = qf[:, h * hd:(h + 1) * hd].astype(jnp.float32)
        k = kv[:, h * hd:(h + 1) * hd].astype(jnp.float32)
        v = kv[:, D + h * hd:D + (h + 1) * hd].astype(jnp.float32)
        s = jnp.dot(q, k.T, preferred_element_type=jnp.float32) * scale
        p = _softmax_rows(s)
        outs.append(jnp.dot(p, v, preferred_element_type=jnp.float32))
    o_ref[0] = jnp.concatenate(outs, axis=-1).astype(o_ref.dtype)


def self_attention(qkv, cos, sin, H):
    # qkv: (B, S, 3D) with columns [Q | K | V], heads contiguous inside each.
    B, S, threeD = qkv.shape
    D = threeD // 3
    hd = D // H
    kern = functools.partial(_self_attn_kernel, H=H, hd=hd,
                             scale=1.0 / math.sqrt(hd))
    return pl.pallas_call(
        kern,
        out_shape=jax.ShapeDtypeStruct((B, S, D), qkv.dtype),
        grid=(B,),
        in_specs=[pl.BlockSpec((1, S, threeD), lambda b: (b, 0, 0)),
                  pl.BlockSpec((S, hd), lambda b: (0, 0)),
                  pl.BlockSpec((S, hd), lambda b: (0, 0))],
        out_specs=pl.BlockSpec((1, S, D), lambda b: (b, 0, 0)),
        compiler_params=pltpu.CompilerParams(dimension_semantics=("parallel",)),
    )(qkv, cos, sin)


def cross_attention(q, kv, H):
    # q: (B, Sq, D); kv: (B, Sk, 2D) = [K | V]
    B, Sq, D = q.shape
    Sk = kv.shape[1]
    hd = D // H
    kern = functools.partial(_cross_attn_kernel, H=H, hd=hd,
                             scale=1.0 / math.sqrt(hd))
    return pl.pallas_call(
        kern,
        out_shape=jax.ShapeDtypeStruct((B, Sq, D), q.dtype),
        grid=(B,),
        in_specs=[pl.BlockSpec((1, Sq, D), lambda b: (b, 0, 0)),
                  pl.BlockSpec((1, Sk, 2 * D), lambda b: (b, 0, 0))],
        out_specs=pl.BlockSpec((1, Sq, D), lambda b: (b, 0, 0)),
        compiler_params=pltpu.CompilerParams(dimension_semantics=("parallel",)),
    )(q, kv)


# ------------------- fused RMSNorm + MLP + residual --------------------------
def _norm_mlp_res_kernel(x_ref, nw_ref, w1_ref, b1_ref, w2_ref, b2_ref, o_ref):
    x = x_ref[...].astype(jnp.float32)                       # (tm, D)
    ms = jnp.mean(x * x, axis=-1, keepdims=True)
    xn = x * jax.lax.rsqrt(ms + EPS) * nw_ref[...].astype(jnp.float32)
    h = jnp.dot(xn.astype(w1_ref.dtype), w1_ref[...],
                preferred_element_type=jnp.float32) + b1_ref[...].astype(jnp.float32)
    # TODO(synk): reference MLP class not shown; torch nn.GELU() defaults to the
    # exact erf variant -- tanh approximation used here for robust TPU lowering.
    h = jax.nn.gelu(h)
    y = jnp.dot(h.astype(w2_ref.dtype), w2_ref[...],
                preferred_element_type=jnp.float32) + b2_ref[...].astype(jnp.float32)
    o_ref[...] = (y + x).astype(o_ref.dtype)                 # fused residual


def norm_mlp_residual(x2, nw, w1, b1, w2, b2):
    M, D = x2.shape
    Hdn = w1.shape[1]
    tm = _tile(M, 256, 8)
    return pl.pallas_call(
        _norm_mlp_res_kernel,
        out_shape=jax.ShapeDtypeStruct((M, D), x2.dtype),
        grid=(M // tm,),
        in_specs=[pl.BlockSpec((tm, D), lambda i: (i, 0)),
                  pl.BlockSpec((1, D), lambda i: (0, 0)),
                  pl.BlockSpec((D, Hdn), lambda i: (0, 0)),
                  pl.BlockSpec((1, Hdn), lambda i: (0, 0)),
                  pl.BlockSpec((Hdn, D), lambda i: (0, 0)),
                  pl.BlockSpec((1, D), lambda i: (0, 0))],
        out_specs=pl.BlockSpec((tm, D), lambda i: (i, 0)),
        compiler_params=pltpu.CompilerParams(dimension_semantics=("parallel",)),
    )(x2, nw, w1, b1, w2, b2)


# ----------------------------- rotary tables --------------------------------
def rotary_cos_sin(S, hd):
    half = hd // 2
    inv_freq = 1.0 / (10000.0 ** (jnp.arange(half, dtype=jnp.float32) / half))
    pos = jnp.arange(S, dtype=jnp.float32)
    ang = pos[:, None] * inv_freq[None, :]
    cos = jnp.concatenate([jnp.cos(ang), jnp.cos(ang)], axis=-1)
    sin = jnp.concatenate([jnp.sin(ang), jnp.sin(ang)], axis=-1)
    return cos, sin                                   # f32, applied in f32 in-kernel


# ----------------------------- transformer block -----------------------------
def transformer_block_decoder(params, X, cond):
    B, S, D = X.shape
    Sc, Dc = cond.shape[1], cond.shape[2]
    H = params["num_heads"]
    hd = D // H

    X2 = X.reshape(B * S, D)                          # free reshape (no transpose)

    # --- self-attention: X = out_proj(attn(rope(qkv(norm1(X))))) + X ---
    qkv = norm_matmul(X2, params["norm1_w"], params["attn_qkv_w"])      # (B*S, 3D)
    # TODO(synk): total_downscale_factor's effect on rotary positions is unknown;
    # plain arange positions are used.
    cos, sin = rotary_cos_sin(S, hd)
    attn_out = self_attention(qkv.reshape(B, S, 3 * D), cos, sin, H)    # (B, S, D)
    X2 = matmul_residual(attn_out.reshape(B * S, D), params["attn_out_w"], X2)

    # --- cross-attention: X = out_proj(attn(q, k, v)) + X ---
    q = norm_matmul(X2, params["norm2_w"], params["query_w"])           # (B*S, D)
    kv_w = jnp.concatenate([params["key_w"], params["value_w"]], axis=1)  # (Dc, 2D)
    kv = norm_matmul(cond.reshape(B * Sc, Dc), params["norm_cond_w"], kv_w)  # (B*Sc, 2D)
    # TODO(synk): rotary is not applied to cross-attention q/k (q and cond live
    # in different position spaces); matches previous implementation.
    cross_out = cross_attention(q.reshape(B, S, D), kv.reshape(B, Sc, 2 * D), H)
    X2 = matmul_residual(cross_out.reshape(B * S, D), params["cross_out_w"], X2)

    # --- MLP: return MLP(norm3(X)) + X (fully fused) ---
    out = norm_mlp_residual(X2, params["norm3_w"],
                            params["mlp_w1"], params["mlp_b1"],
                            params["mlp_w2"], params["mlp_b2"])
    return out.reshape(B, S, D)


# ----------------------------- parameter init --------------------------------
def init_params(key, dim, cond_dim, hidden_scale=4.0, num_heads=8):
    hidden = int(dim * hidden_scale)
    ks = jax.random.split(key, 8)

    def w(k, shape):
        return jax.random.normal(k, shape, jnp.float32) * 0.02

    return {
        "num_heads": num_heads,
        "norm1_w": jnp.ones((1, dim), jnp.float32),
        "norm2_w": jnp.ones((1, dim), jnp.float32),
        "norm3_w": jnp.ones((1, dim), jnp.float32),
        "norm_cond_w": jnp.ones((1, cond_dim), jnp.float32),
        "attn_qkv_w": w(ks[0], (dim, 3 * dim)),
        "attn_out_w": w(ks[1], (dim, dim)),
        "query_w": w(ks[2], (dim, dim)),
        "key_w": w(ks[3], (cond_dim, dim)),
        "value_w": w(ks[4], (cond_dim, dim)),
        "cross_out_w": w(ks[5], (dim, dim)),
        "mlp_w1": w(ks[6], (dim, hidden)),
        "mlp_b1": jnp.zeros((1, hidden), jnp.float32),
        "mlp_w2": w(ks[7], (hidden, dim)),
        "mlp_b2": jnp.zeros((1, dim), jnp.float32),
    }


if __name__ == "__main__":
    key = jax.random.PRNGKey(0)
    B, S, D = 2, 8, 64          # batch, sequence, model dim
    Sc, Dc = 8, 32              # cond sequence, cond dim
    H = 8                       # num_heads -> head_dim = 8

    kx, kc, kp = jax.random.split(key, 3)
    X = jax.random.normal(kx, (B, S, D), jnp.float32)
    cond = jax.random.normal(kc, (B, Sc, Dc), jnp.float32)
    params = init_params(kp, D, Dc, hidden_scale=4.0, num_heads=H)

    out = transformer_block_decoder(params, X, cond)
    jax.block_until_ready(out)
    assert out.shape == (B, S, D) and out.dtype == jnp.float32
    print("KERNEL_OK")
</pallas_src>

<mosaic_0001>
module attributes {stable_mosaic.version = 11 : i64} {
  func.func @_norm_matmul_kernel(%arg0: i32, %arg1: i32, %arg2: memref<16x64xf32, #tpu.memory_space<vmem>>, %arg3: memref<1x64xf32, #tpu.memory_space<vmem>>, %arg4: memref<64x192xf32, #tpu.memory_space<vmem>>, %arg5: memref<16x192xf32, #tpu.memory_space<vmem>>) attributes {dimension_semantics = [#tpu.dimension_semantics<parallel>, #tpu.dimension_semantics<parallel>], iteration_bounds = array<i64: 1, 1>, scalar_prefetch = 0 : i64, scratch_operands = 0 : i64, tpu.core_type = #tpu.core_type<tc>, window_params = [{transform_indices = @transform_0, window_bounds = array<i64: 16, 64>}, {pipeline_mode = #tpu.pipeline_mode<synchronous>, transform_indices = @transform_1, window_bounds = array<i64: 1, 64>}, {transform_indices = @transform_2, window_bounds = array<i64: 64, 192>}, {transform_indices = @transform_3, window_bounds = array<i64: 16, 192>}]} {
    %c0 = arith.constant 0 : index
    %c0_0 = arith.constant 0 : index
    %0 = vector.load %arg2[%c0, %c0_0] : memref<16x64xf32, #tpu.memory_space<vmem>>, vector<16x64xf32>
    %1 = arith.mulf %0, %0 : vector<16x64xf32>
    %cst = arith.constant dense<0.000000e+00> : vector<16xf32>
    %2 = vector.multi_reduction <add>, %1, %cst [1] : vector<16x64xf32> to vector<16xf32>
    %3 = vector.shape_cast %2 : vector<16xf32> to vector<16x1xf32>
    %cst_1 = arith.constant 6.400000e+01 : f32
    %4 = vector.broadcast %cst_1 : f32 to vector<16x1xf32>
    %5 = arith.divf %3, %4 : vector<16x1xf32>
    %cst_2 = arith.constant 1.1920929E-7 : f32
    %6 = vector.broadcast %cst_2 : f32 to vector<16x1xf32>
    %7 = arith.addf %5, %6 : vector<16x1xf32>
    %8 = math.rsqrt %7 : vector<16x1xf32>
    %9 = vector.broadcast %8 : vector<16x1xf32> to vector<16x64xf32>
    %10 = arith.mulf %0, %9 : vector<16x64xf32>
    %c0_3 = arith.constant 0 : index
    %c0_4 = arith.constant 0 : index
    %11 = vector.load %arg3[%c0_3, %c0_4] : memref<1x64xf32, #tpu.memory_space<vmem>>, vector<1x64xf32>
    %12 = vector.broadcast %11 : vector<1x64xf32> to vector<16x64xf32>
    %13 = arith.mulf %10, %12 : vector<16x64xf32>
    %c0_5 = arith.constant 0 : index
    %c0_6 = arith.constant 0 : index
    %14 = vector.load %arg4[%c0_5, %c0_6] : memref<64x192xf32, #tpu.memory_space<vmem>>, vector<64x192xf32>
    %cst_7 = arith.constant dense<0.000000e+00> : vector<16x192xf32>
    %15 = tpu.matmul %13, %14, %cst_7 {dimension_numbers = #tpu.dot_dimension_numbers<[1], [0], [0], [1], [0, 0, 1, 1], [], []>} : vector<16x64xf32>, vector<64x192xf32>, vector<16x192xf32> -> vector<16x192xf32>
    %c0_8 = arith.constant 0 : index
    %c0_9 = arith.constant 0 : index
    %16 = vector.load %arg5[%c0_8, %c0_9] : memref<16x192xf32, #tpu.memory_space<vmem>>, vector<16x192xf32>
    tpu.vector_store %arg5[%c0_8, %c0_9], %15 {strides = array<i32>} : memref<16x192xf32, #tpu.memory_space<vmem>>, vector<16x192xf32>,
    return
  }
  func.func @transform_0(%arg0: i32, %arg1: i32) -> (i32, i32) {
    %c0_i32 = arith.constant 0 : i32
    %c0_i32_0 = arith.constant 0 : i32
    return %arg0, %c0_i32 : i32, i32
  }
  func.func @transform_1(%arg0: i32, %arg1: i32) -> (i32, i32) {
    %c0_i32 = arith.constant 0 : i32
    %c0_i32_0 = arith.constant 0 : i32
    %c0_i32_1 = arith.constant 0 : i32
    return %c0_i32, %c0_i32_0 : i32, i32
  }
  func.func @transform_2(%arg0: i32, %arg1: i32) -> (i32, i32) {
    %c0_i32 = arith.constant 0 : i32
    %c0_i32_0 = arith.constant 0 : i32
    return %c0_i32, %arg1 : i32, i32
  }
  func.func @transform_3(%arg0: i32, %arg1: i32) -> (i32, i32) {
    %c0_i32 = arith.constant 0 : i32
    return %arg0, %arg1 : i32, i32
  }
}

</mosaic_0001>

<llo_original>
// kernel: tpu_custom_call.1
$region0: #{tpu_custom_call.1}
  #allocation0 [shape = 'u32[]', space=smem, size = 0x4, offset = 0x4, fixed_abs, tag = 'smem constant byte address 0x4 - core index']
  #allocation1 [shape = 'u32[144,128]{1,0:T(1,128)}', space=vmem, size = 0x12000, scoped, tag = 'internal scratch']
  %s0 = inlined_call_operand.hbm [shape: f32[16,64], index: 0, kind: input, shape index: {}]
  %s1 = inlined_call_operand.vmem [shape: f32[1,64], index: 1, kind: input, shape index: {}]
  %s2 = inlined_call_operand.hbm [shape: f32[64,192], index: 2, kind: input, shape index: {}]
  %s3 = inlined_call_operand.hbm [shape: f32[16,192], index: 3, kind: output, shape index: {}]
  %s4 = sld [smem:[#allocation0]]
  $region30: #{tpu_custom_call.1} parent=0
    _
  %s6 = ssub.s32 1, %s4
  %s7 = scalar_select 0, %s6, %s4
  $region1: #{tpu_custom_call.1} parent=0
    #allocation2 [shape = 'u8[8192]{0}', space=vmem, size = 0x2000, scoped, tag = 'input window, operand 0, single buffered']
    #allocation3 [shape = 's32[1]{0}', space=sflag, size = 0x4, scoped, tag = 'scoped memory for tpu_custom_call.1']
    #allocation4 [shape = 's32[1]{0}', space=sflag, size = 0x4, scoped, tag = 'scoped memory for tpu_custom_call.1']
    #allocation5 [shape = 'u8[65536]{0}', space=vmem, size = 0x10000, scoped, tag = 'input window, operand 2, single buffered']
    #allocation6 [shape = 's32[1]{0}', space=sflag, size = 0x4, scoped, tag = 'scoped memory for tpu_custom_call.1']
    #allocation7 [shape = 'u8[16384]{0}', space=vmem, size = 0x4000, scoped, tag = 'output window, operand 0, single buffered']
    %8 = vsyncpa [#allocation3], 0
    %9 = vsyncpa [#allocation6], 0
    %10 = vsyncpa [#allocation4], 0
    // Predicated region
    $region2: #{tpu_custom_call.1} parent=1 // pred_check
      _
    $region3: #{tpu_custom_call.1} parent=1 // pred_check_branch
      %12 = sbr.rel (0) target = $region5
    $region4: #{tpu_custom_call.1} parent=1 // pred_region
      %s14 = ssub.s32 256, 256
      %15 = vsyncadd [#allocation3], %s14
      %s16 = sshll.u32 [#allocation2], 4
      %s17 = int_to_ptr.vmem [resolvable:$true] %s16
      %22 = dma.hbm_to_vmem [thread:$0]  %s0, 256, %s17, [#allocation3], 128, 128, 8
    $region5: #{tpu_custom_call.1} parent=1 // pred_fallthru
      _
    // Predicated region
    $region6: #{tpu_custom_call.1} parent=1 // pred_check
      _
    $region7: #{tpu_custom_call.1} parent=1 // pred_check_branch
      %24 = sbr.rel (0) target = $region9
    $region8: #{tpu_custom_call.1} parent=1 // pred_region
      _
    $region9: #{tpu_custom_call.1} parent=1 // pred_fallthru
      _
    // Predicated region
    $region10: #{tpu_custom_call.1} parent=1 // pred_check
      _
    $region11: #{tpu_custom_call.1} parent=1 // pred_check_branch
      %26 = sbr.rel (0) target = $region13
    $region12: #{tpu_custom_call.1} parent=1 // pred_region
      %s28 = ssub.s32 2048, 2048
      %29 = vsyncadd [#allocation6], %s28
      %s30 = sshll.u32 [#allocation5], 4
      %s31 = int_to_ptr.vmem [resolvable:$true] %s30
      %36 = dma.hbm_to_vmem [thread:$0]  %s2, 2048, %s31, [#allocation6], 256, 256, 16
    $region13: #{tpu_custom_call.1} parent=1 // pred_fallthru
      _
    // Predicated region
    $region14: #{tpu_custom_call.1} parent=1 // pred_check
      _
    $region15: #{tpu_custom_call.1} parent=1 // pred_check_branch
      %38 = sbr.rel (0) target = $region17
    $region16: #{tpu_custom_call.1} parent=1 // pred_region
      %39 = dma.done [#allocation3], 256
    $region17: #{tpu_custom_call.1} parent=1 // pred_fallthru
      _
    // Predicated region
    $region18: #{tpu_custom_call.1} parent=1 // pred_check
      _
    $region19: #{tpu_custom_call.1} parent=1 // pred_check_branch
      %41 = sbr.rel (0) target = $region21
    $region20: #{tpu_custom_call.1} parent=1 // pred_region
      %42 = dma.done [#allocation6], 2048
    $region21: #{tpu_custom_call.1} parent=1 // pred_fallthru
      _
    %v43 = vld [vmem:[#allocation2] sm:$0xff]
    %v44 = vld [vmem:[#allocation2 + $0x8] sm:$0xff]
    %v45 = vmul.f32 %v43, %v43
    %v46 = vmul.f32 %v44, %v44
    %vm47 = vcmask 523264
    %v48 = vsel %vm47, %v45, 0.0
    %49 = vadd.xlane.f32.xlu0 %v48
    %v50 = vpop.xlane.xlu0 %49
    %v51 = vsel %vm47, %v46, 0.0
    %52 = vadd.xlane.f32.xlu0 %v51
    %v53 = vpop.xlane.xlu0 %52
    %v54 = vrcp.pop 64.0
    %v55 = vmul.f32 %v50, %v54
    %v56 = vmul.f32 %v53, %v54
    %v57 = vadd.f32 %v55, 1.1920929e-07
    %v58 = vadd.f32 %v56, 1.1920929e-07
    %v59 = vrsqrt.pop %v57
    %v60 = vrsqrt.pop %v58
    %v61 = vmul.f32 %v43, %v59
    %v62 = vmul.f32 %v44, %v60
    %v63 = vld [vmem:[%s1] sm:$0x1]
    %v65 = vlaneseq
    %v66 = vshrl.u32 %v65, 7
    %v67 = vsub.s32 0, %v66
    %v68 = vrot.slane %v63, %v67
    %v70 = vmul.f32 %v61, %v68
    %v71 = vmul.f32 %v62, %v68
    %v72 = vld [vmem:[#allocation5] sm:$0xff]
    %v73 = vld [vmem:[#allocation5 + $0x8] sm:$0xff]
    %v74 = vld [vmem:[#allocation5 + $0x10] sm:$0xff]
    %v75 = vld [vmem:[#allocation5 + $0x18] sm:$0xff]
    %v76 = vld [vmem:[#allocation5 + $0x20] sm:$0xff]
    %v77 = vld [vmem:[#allocation5 + $0x28] sm:$0xff]
    %v78 = vld [vmem:[#allocation5 + $0x30] sm:$0xff]
    %v79 = vld [vmem:[#allocation5 + $0x38] sm:$0xff]
    %v80 = vld [vmem:[#allocation5 + $0x40] sm:$0xff]
    %v81 = vld [vmem:[#allocation5 + $0x48] sm:$0xff]
    %v82 = vld [vmem:[#allocation5 + $0x50] sm:$0xff]
    %v83 = vld [vmem:[#allocation5 + $0x58] sm:$0xff]
    %v84 = vld [vmem:[#allocation5 + $0x60] sm:$0xff]
    %v85 = vld [vmem:[#allocation5 + $0x68] sm:$0xff]
    %v86 = vld [vmem:[#allocation5 + $0x70] sm:$0xff]
    %v87 = vld [vmem:[#allocation5 + $0x78] sm:$0xff]
    %v89 = vsel %vm47, %v70, 0
    %v92 = vsel %vm47, %v71, 0
    %94 = vmatprep.subr.mxu0 0.0
    %95 = vmatpush1.msra.mxu0 0.0
    %96 = vmatprep.subr.mxu0 0.0
    %97 = vmatpush1.msra.mxu0 0.0
    %98 = vmatprep.subr.mxu0 0.0
    %99 = vmatpush1.msra.mxu0 0.0
    %100 = vmatprep.subr.mxu0 0.0
    %101 = vmatpush1.msra.mxu0 0.0
    %102 = vmatprep.subr.mxu0 0.0
    %103 = vmatpush1.msra.mxu0 0.0
    %104 = vmatprep.subr.mxu0 0.0
    %105 = vmatpush1.msra.mxu0 0.0
    %106 = vmatprep.subr.mxu0 0.0
    %107 = vmatpush1.msra.mxu0 0.0
    %108 = vmatprep.subr.mxu0 0.0
    %109 = vmatpush1.msra.mxu0 0.0
    %110 = vmatprep.subr.mxu0 %v87
    %111 = vmatpush1.msra.mxu0 %v86
    %112 = vmatprep.subr.mxu0 %v85
    %113 = vmatpush1.msra.mxu0 %v84
    %114 = vmatprep.subr.mxu0 %v83
    %115 = vmatpush1.msra.mxu0 %v82
    %116 = vmatprep.subr.mxu0 %v81
    %117 = vmatpush1.msra.mxu0 %v80
    %118 = vmatprep.subr.mxu0 %v79
    %119 = vmatpush1.msra.mxu0 %v78
    %120 = vmatprep.subr.mxu0 %v77
    %121 = vmatpush1.msra.mxu0 %v76
    %122 = vmatprep.subr.mxu0 %v75
    %123 = vmatpush1.msra.mxu0 %v74
    %124 = vmatprep.subr.mxu0 %v73
    %125 = vmatpush1.msra.mxu0 %v72
    %126 = vmatprep.subr.mxu0 0.0
    %127 = vmatpush2.msra.mxu0 0.0
    %128 = vmatprep.subr.mxu0 0.0
    %129 = vmatpush2.msra.mxu0 0.0
    %130 = vmatprep.subr.mxu0 0.0
    %131 = vmatpush2.msra.mxu0 0.0
    %132 = vmatprep.subr.mxu0 0.0
    %133 = vmatpush2.msra.mxu0 0.0
    %134 = vmatprep.subr.mxu0 0.0
    %135 = vmatpush2.msra.mxu0 0.0
    %136 = vmatprep.subr.mxu0 0.0
    %137 = vmatpush2.msra.mxu0 0.0
    %138 = vmatprep.subr.mxu0 0.0
    %139 = vmatpush2.msra.mxu0 0.0
    %140 = vmatprep.subr.mxu0 0.0
    %141 = vmatpush2.msra.mxu0 0.0
    %142 = vmatprep.subr.mxu0 0.0
    %143 = vmatpush2.msra.mxu0 0.0
    %144 = vmatprep.subr.mxu0 0.0
    %145 = vmatpush2.msra.mxu0 0.0
    %146 = vmatprep.subr.mxu0 0.0
    %147 = vmatpush2.msra.mxu0 0.0
    %148 = vmatprep.subr.mxu0 0.0
    %149 = vmatpush2.msra.mxu0 0.0
    %150 = vmatprep.subr.mxu0 0.0
    %151 = vmatpush2.msra.mxu0 0.0
    %152 = vmatprep.subr.mxu0 0.0
    %153 = vmatpush2.msra.mxu0 0.0
    %154 = vmatprep.subr.mxu0 0.0
    %155 = vmatpush2.msra.mxu0 0.0
    %156 = vmatprep.subr.mxu0 0.0
    %157 = vmatpush2.msra.mxu0 0.0
    %158 = vmatprep.mubr.f32.mxu0 0.0
    %159 = vmatmul.mubr.f32.gmra.mxu0 %v89
    %v160 = vpop.f32.mrf.mxu0
    %v161 = vadd.f32 0.0, %v160
    %v162 = vpop.f32.mrf.mxu0
    %v163 = vadd.f32 0.0, %v162
    %164 = vmatprep.mubr.f32.mxu0 0.0
    %165 = vmatmul.mubr.f32.gmra.mxu0 %v92
    %v166 = vpop.f32.mrf.mxu0
    %v167 = vadd.f32 0.0, %v166
    %v168 = vpop.f32.mrf.mxu0
    %v169 = vadd.f32 0.0, %v168
    %170 = vdwg.mxu0
    %171 = vst [vmem:[#allocation7] sm:$0xff] %v161
    %172 = vst.msk [vmem:[#allocation7 + $0x8] sm:$0xff] %vm47, %v163
    %173 = vst [vmem:[#allocation7 + $0x10] sm:$0xff] %v167
    %174 = vst.msk [vmem:[#allocation7 + $0x18] sm:$0xff] %vm47, %v169
    // Predicated region
    $region22: #{tpu_custom_call.1} parent=1 // pred_check
      _
    $region23: #{tpu_custom_call.1} parent=1 // pred_check_branch
      %176 = sbr.rel (0) target = $region25
    $region24: #{tpu_custom_call.1} parent=1 // pred_region
      %s178 = ssub.s32 512, 512
      %179 = vsyncadd [#allocation4], %s178
      %s180 = sshll.u32 [#allocation7], 4
      %s181 = int_to_ptr.vmem [resolvable:$true] %s180
      %186 = dma.vmem_to_hbm [thread:$0]  %s181, 512, %s3, [#allocation4], 256, 256, 16
    $region25: #{tpu_custom_call.1} parent=1 // pred_fallthru
      _
    // Predicated region
    $region26: #{tpu_custom_call.1} parent=1 // pred_check
      _
    $region27: #{tpu_custom_call.1} parent=1 // pred_check_branch
      %188 = sbr.rel (0) target = $region29
    $region28: #{tpu_custom_call.1} parent=1 // pred_region
      %189 = dma.done [#allocation4], 512
    $region29: #{tpu_custom_call.1} parent=1 // pred_fallthru
      _
    %190 = vsyncpa [#allocation3], 1
    %191 = vsyncpa [#allocation6], 1
    %192 = vsyncpa [#allocation4], 1

</llo_original>
